<compile_context>
chip_gen: v5e
topology: v5e:2x2
jax: 0.10.0
libtpu: 0.0.40
codegen_flags: <defaults>
</compile_context>

<pallas_src>
import functools

import jax
import jax.numpy as jnp
from jax.experimental import pallas as pl
from jax.experimental.pallas import tpu as pltpu

_LANES = 128
_SUBLANES = 8


def _layernorm_kernel(x_ref, g_ref, o_ref, *, eps, inv_c):
    # x_ref: (C, R_tile, 128) for one batch element / one spatial tile.
    # g_ref: (C, 1, 128) float32 scale (same value replicated across lanes).
    x = x_ref[...].astype(jnp.float32)
    mean = jnp.sum(x, axis=0, keepdims=True) * inv_c            # (1, R_tile, 128)
    d = x - mean                                                # reused for var and output
    var = jnp.sum(d * d, axis=0, keepdims=True) * inv_c         # biased (unbiased=False)
    scale = jax.lax.rsqrt(var + eps) * g_ref[...]               # broadcast -> (C, R_tile, 128)
    o_ref[...] = (d * scale).astype(o_ref.dtype)


def layer_norm(x, g, *, target_tile_bytes=2 * 1024 * 1024):
    """x: (B, C, H, W); g: (1, C, 1, 1). Returns (B, C, H, W), same dtype as x."""
    B, C, H, W = x.shape
    # PyTorch eps convention: 1e-5 for fp32, 1e-3 otherwise.
    eps = 1e-5 if x.dtype == jnp.float32 else 1e-3
    HW = H * W
    itemsize = jnp.dtype(x.dtype).itemsize

    # ---- tile sizing: lane-dense rows of 128, C on the leading axis ----
    n_rows = pl.cdiv(HW, _LANES)                      # spatial rows of 128 lanes
    bytes_per_row = C * _LANES * itemsize
    rows_per_tile = max(1, target_tile_bytes // bytes_per_row)
    if rows_per_tile >= n_rows:
        rows_per_tile = n_rows                        # single spatial tile (block == full dim)
    else:
        # multi-tile: sublane dim of the block must be a multiple of 8
        rows_per_tile = max(_SUBLANES, (rows_per_tile // _SUBLANES) * _SUBLANES)
    n_tiles = pl.cdiv(n_rows, rows_per_tile)
    rows_padded = n_tiles * rows_per_tile
    HW_padded = rows_padded * _LANES

    # ---- reshape x to lane-dense (B, C, rows, 128), zero-padding the tail ----
    x_flat = x.reshape(B, C, HW)
    if HW_padded != HW:
        # Zero-padded columns produce mean=0, var=0, output=0 (sliced off below); no NaNs.
        x_flat = jnp.pad(x_flat, ((0, 0), (0, 0), (0, HW_padded - HW)))
    x4 = x_flat.reshape(B, C, rows_padded, _LANES)

    # g stays float32 (matches the fp32 nn.Parameter); tiny (C, 1, 128) slab.
    g_b = jnp.broadcast_to(g.reshape(C, 1, 1).astype(jnp.float32), (C, 1, _LANES))

    kernel = functools.partial(_layernorm_kernel, eps=eps, inv_c=1.0 / C)

    tile_bytes = C * rows_per_tile * _LANES * itemsize
    # Double-buffered in + out tiles plus g and slack; capped well below v7x's 64 MiB VMEM.
    vmem_limit = int(min(48 * 1024 * 1024,
                         max(16 * 1024 * 1024, 6 * tile_bytes + (1 << 20))))

    cost = pl.CostEstimate(
        flops=int(7 * B * C * HW_padded),
        transcendentals=int(B * HW_padded),
        bytes_accessed=int(2 * B * C * HW_padded * itemsize + C * _LANES * 4),
    )

    out4 = pl.pallas_call(
        kernel,
        out_shape=jax.ShapeDtypeStruct((B, C, rows_padded, _LANES), x.dtype),
        grid_spec=pltpu.PrefetchScalarGridSpec(
            num_scalar_prefetch=0,
            grid=(B, n_tiles),
            in_specs=[
                # x: one batch element, one spatial tile per grid step (batch dim squeezed)
                pl.BlockSpec((None, C, rows_per_tile, _LANES), lambda b, s: (b, 0, s, 0)),
                # g: same tiny tile every step
                pl.BlockSpec((C, 1, _LANES), lambda b, s: (0, 0, 0)),
            ],
            out_specs=pl.BlockSpec((None, C, rows_per_tile, _LANES),
                                   lambda b, s: (b, 0, s, 0)),
        ),
        compiler_params=pltpu.CompilerParams(
            dimension_semantics=("parallel", "parallel"),
            vmem_limit_bytes=vmem_limit,
        ),
        cost_estimate=cost,
    )(x4, g_b)

    out_flat = out4.reshape(B, C, HW_padded)
    if HW_padded != HW:
        out_flat = out_flat[:, :, :HW]
    return out_flat.reshape(B, C, H, W)


def _layer_norm_ref(x, g):
    eps = 1e-5 if x.dtype == jnp.float32 else 1e-3
    xf = x.astype(jnp.float32)
    mean = jnp.mean(xf, axis=1, keepdims=True)
    var = jnp.mean((xf - mean) ** 2, axis=1, keepdims=True)
    return ((xf - mean) * jax.lax.rsqrt(var + eps) * g.astype(jnp.float32)).astype(x.dtype)


if __name__ == "__main__":
    key = jax.random.PRNGKey(0)

    # Case 1: canonical small shape (B=2, C=4, 16x16), H*W multiple of 128.
    B, C, H, W = 2, 4, 16, 16
    x = jax.random.normal(key, (B, C, H, W), dtype=jnp.float32)
    g = jnp.ones((1, C, 1, 1), dtype=jnp.float32)  # matches nn.Parameter(torch.ones(1,dim,1,1))
    out = layer_norm(x, g)
    jax.block_until_ready(out)
    ref = _layer_norm_ref(x, g)
    assert out.shape == x.shape and out.dtype == x.dtype
    assert jnp.allclose(out, ref, atol=1e-5, rtol=1e-5)

    # Case 2: H*W not a multiple of 128 -> exercises the lane-padding path.
    x2 = jax.random.normal(jax.random.PRNGKey(1), (2, 4, 10, 10), dtype=jnp.float32)
    out2 = layer_norm(x2, g)
    jax.block_until_ready(out2)
    assert jnp.allclose(out2, _layer_norm_ref(x2, g), atol=1e-5, rtol=1e-5)

    # Case 3: force multiple spatial tiles (small target tile) -> exercises grid axis 1.
    x3 = jax.random.normal(jax.random.PRNGKey(2), (2, 4, 64, 64), dtype=jnp.float32)
    out3 = layer_norm(x3, g, target_tile_bytes=16 * 1024)
    jax.block_until_ready(out3)
    assert jnp.allclose(out3, _layer_norm_ref(x3, g), atol=1e-5, rtol=1e-5)

    print("KERNEL_OK")
</pallas_src>

<mosaic_0001>
module attributes {stable_mosaic.version = 11 : i64} {
  func.func @_layernorm_kernel(%arg0: i32, %arg1: i32, %arg2: memref<1x4x2x128xf32, #tpu.memory_space<vmem>>, %arg3: memref<4x1x128xf32, #tpu.memory_space<vmem>>, %arg4: memref<1x4x2x128xf32, #tpu.memory_space<vmem>>) attributes {dimension_semantics = [#tpu.dimension_semantics<parallel>, #tpu.dimension_semantics<parallel>], iteration_bounds = array<i64: 2, 1>, scalar_prefetch = 0 : i64, scratch_operands = 0 : i64, tpu.core_type = #tpu.core_type<tc>, window_params = [{transform_indices = @transform_0, window_bounds = array<i64: 1, 4, 2, 128>}, {pipeline_mode = #tpu.pipeline_mode<synchronous>, transform_indices = @transform_1, window_bounds = array<i64: 4, 1, 128>}, {transform_indices = @transform_2, window_bounds = array<i64: 1, 4, 2, 128>}]} {
    %c0 = arith.constant 0 : index
    %c0_0 = arith.constant 0 : index
    %c0_1 = arith.constant 0 : index
    %c0_2 = arith.constant 0 : index
    %0 = vector.load %arg2[%c0, %c0_0, %c0_1, %c0_2] : memref<1x4x2x128xf32, #tpu.memory_space<vmem>>, vector<1x4x2x128xf32>
    %1 = vector.shape_cast %0 : vector<1x4x2x128xf32> to vector<4x2x128xf32>
    %cst = arith.constant dense<0.000000e+00> : vector<2x128xf32>
    %2 = vector.multi_reduction <add>, %1, %cst [0] : vector<4x2x128xf32> to vector<2x128xf32>
    %3 = vector.shape_cast %2 : vector<2x128xf32> to vector<1x2x128xf32>
    %cst_3 = arith.constant 2.500000e-01 : f32
    %4 = vector.broadcast %cst_3 : f32 to vector<1x2x128xf32>
    %5 = arith.mulf %3, %4 : vector<1x2x128xf32>
    %6 = vector.broadcast %5 : vector<1x2x128xf32> to vector<4x2x128xf32>
    %7 = arith.subf %1, %6 : vector<4x2x128xf32>
    %8 = arith.mulf %7, %7 : vector<4x2x128xf32>
    %cst_4 = arith.constant dense<0.000000e+00> : vector<2x128xf32>
    %9 = vector.multi_reduction <add>, %8, %cst_4 [0] : vector<4x2x128xf32> to vector<2x128xf32>
    %10 = vector.shape_cast %9 : vector<2x128xf32> to vector<1x2x128xf32>
    %cst_5 = arith.constant 2.500000e-01 : f32
    %11 = vector.broadcast %cst_5 : f32 to vector<1x2x128xf32>
    %12 = arith.mulf %10, %11 : vector<1x2x128xf32>
    %cst_6 = arith.constant 9.99999974E-6 : f32
    %13 = vector.broadcast %cst_6 : f32 to vector<1x2x128xf32>
    %14 = arith.addf %12, %13 : vector<1x2x128xf32>
    %15 = math.rsqrt %14 : vector<1x2x128xf32>
    %c0_7 = arith.constant 0 : index
    %c0_8 = arith.constant 0 : index
    %c0_9 = arith.constant 0 : index
    %16 = vector.load %arg3[%c0_7, %c0_8, %c0_9] : memref<4x1x128xf32, #tpu.memory_space<vmem>>, vector<4x1x128xf32>
    %17 = vector.broadcast %15 : vector<1x2x128xf32> to vector<4x2x128xf32>
    %18 = vector.broadcast %16 : vector<4x1x128xf32> to vector<4x2x128xf32>
    %19 = arith.mulf %17, %18 : vector<4x2x128xf32>
    %20 = arith.mulf %7, %19 : vector<4x2x128xf32>
    %c0_10 = arith.constant 0 : index
    %c0_11 = arith.constant 0 : index
    %c0_12 = arith.constant 0 : index
    %c0_13 = arith.constant 0 : index
    %21 = vector.load %arg4[%c0_10, %c0_11, %c0_12, %c0_13] : memref<1x4x2x128xf32, #tpu.memory_space<vmem>>, vector<1x4x2x128xf32>
    %22 = vector.shape_cast %21 : vector<1x4x2x128xf32> to vector<4x2x128xf32>
    %23 = vector.shape_cast %20 : vector<4x2x128xf32> to vector<1x4x2x128xf32>
    tpu.vector_store %arg4[%c0_10, %c0_11, %c0_12, %c0_13], %23 {strides = array<i32>} : memref<1x4x2x128xf32, #tpu.memory_space<vmem>>, vector<1x4x2x128xf32>,
    return
  }
  func.func @transform_0(%arg0: i32, %arg1: i32) -> (i32, i32, i32, i32) {
    %c0_i32 = arith.constant 0 : i32
    %c0_i32_0 = arith.constant 0 : i32
    %c0_i32_1 = arith.constant 0 : i32
    return %arg0, %c0_i32, %arg1, %c0_i32_0 : i32, i32, i32, i32
  }
  func.func @transform_1(%arg0: i32, %arg1: i32) -> (i32, i32, i32) {
    %c0_i32 = arith.constant 0 : i32
    %c0_i32_0 = arith.constant 0 : i32
    %c0_i32_1 = arith.constant 0 : i32
    %c0_i32_2 = arith.constant 0 : i32
    return %c0_i32, %c0_i32_0, %c0_i32_1 : i32, i32, i32
  }
  func.func @transform_2(%arg0: i32, %arg1: i32) -> (i32, i32, i32, i32) {
    %c0_i32 = arith.constant 0 : i32
    %c0_i32_0 = arith.constant 0 : i32
    %c0_i32_1 = arith.constant 0 : i32
    return %arg0, %c0_i32, %arg1, %c0_i32_0 : i32, i32, i32, i32
  }
}

</mosaic_0001>

<llo_original>
// kernel: tpu_custom_call.1
$region0: #{tpu_custom_call.1}
  #allocation0 [shape = 'u32[]', space=smem, size = 0x4, offset = 0x4, fixed_abs, tag = 'smem constant byte address 0x4 - core index']
  #allocation1 [shape = 'u32[72,128]{1,0:T(1,128)}', space=vmem, size = 0x9000, scoped, tag = 'internal scratch']
  %s0 = inlined_call_operand.hbm [shape: f32[2,4,2,128], index: 0, kind: input, shape index: {}]
  %s1 = inlined_call_operand.hbm [shape: f32[4,1,128], index: 1, kind: input, shape index: {}]
  %s2 = inlined_call_operand.hbm [shape: f32[2,4,2,128], index: 2, kind: output, shape index: {}]
  %s3 = sld [smem:[#allocation0]]
  $region49: #{tpu_custom_call.1} parent=0
    _
  %s5 = ssub.s32 1, %s3
  %s6 = scalar_select 0, %s5, %s3
  $region1: #{tpu_custom_call.1} parent=0
    #allocation2 [shape = 'u8[8192]{0}', space=vmem, size = 0x2000, scoped, tag = 'input window, operand 0']
    #allocation3 [shape = 's32[2]{0}', space=sflag, size = 0x8, scoped, tag = 'scoped memory for tpu_custom_call.1']
    #allocation4 [shape = 's32[2]{0}', space=sflag, size = 0x8, scoped, tag = 'scoped memory for tpu_custom_call.1']
    #allocation5 [shape = 'u8[2048]{0}', space=vmem, size = 0x800, scoped, tag = 'input window, operand 1, single buffered']
    #allocation6 [shape = 's32[1]{0}', space=sflag, size = 0x4, scoped, tag = 'scoped memory for tpu_custom_call.1']
    #allocation7 [shape = 'u8[8192]{0}', space=vmem, size = 0x2000, scoped, tag = 'output window, operand 0']
    %7 = vsyncpa [#allocation3], 0
    %s8 = scalar_lea.sflag [#allocation3], 1
    %9 = vsyncpa %s8, 0
    %10 = vsyncpa [#allocation6], 0
    %11 = vsyncpa [#allocation4], 0
    %s12 = scalar_lea.sflag [#allocation4], 1
    %13 = vsyncpa %s12, 0
    loop: start=0, step=1, limit=4
    $region2: #{tpu_custom_call.1} parent=1 // loop_pre_header
      _
    $region3: #{tpu_custom_call.1} parent=1 // loop_header
      %s15 = sphi 0, %s19
      %p16 = scmp.ge.s32.totalorder %s15, 4
      %s22 = sphi 0, %s34
      %s23 = sphi 0, %s30
      %s24 = sphi 0, %s22
      %s25 = sphi 0, %s23
      %s26 = sphi 0, %s24
      %s27 = sphi 0, %s25
      %s39 = sphi 0, %s41
      %s42 = sphi 0, %s39
      %s43 = sphi 0, %s42
      %s59 = sphi 0, %s43
      %s63 = sphi 0, %s63
      %s65 = sphi 0, %s63
      %s66 = sphi 0, %s65
      %s80 = sphi 0, %s66
      %s88 = sphi 0, %s90
      %s91 = sphi 0, %s88
      %s92 = sphi 0, %s91
      %s108 = sphi 0, %s92
    $region4: #{tpu_custom_call.1} parent=1 // loop_header_branch
      %18 = sbr.rel (%p16) target = $region8
    $region5: #{tpu_custom_call.1} parent=1 // loop_body
      %s20 = ssub.s32 %s15, 1
      %s21 = ssub.s32 %s15, 2
      %s28 = sadd.s32 1, %s23
      %p29 = scmp.ge.s32.totalorder %s28, 1
      %s30 = scalar_select %p29, 0, %s28
      %s31 = sadd.s32 1, %s22
      %s32 = scalar_select %p29, %s31, %s22
      %p33 = scmp.ge.s32.totalorder %s32, 2
      %s34 = scalar_select %p33, 0, %s32
      %s35 = ssub.s32 %s22, %s34
      %s36 = ssub.s32 %s23, %s30
      %s37 = sor.u32 %s35, %s36
      %p38 = scmp.eq.s32.totalorder %s37, 0
      %s40 = sadd.s32 %s39, 1
      %s41 = scalar_select %p38, %s39, %s40
      %p44 = pneg %p38
      %p45 = scmp.eq.s32.totalorder %s15, 1
      %p46 = por %p44, %p45
      %p47 = scmp.ne.s32.totalorder %s39, %s42
      %p48 = scmp.eq.s32.totalorder %s15, 0
      %p49 = por %p47, %p48
      %p50 = scmp.ne.s32.totalorder %s39, %s42
      %p51 = scmp.eq.s32.totalorder %s20, 1
      %p52 = por %p50, %p51
      %p53 = scmp.ne.s32.totalorder %s42, %s43
      %p54 = scmp.eq.s32.totalorder %s20, 0
      %p55 = por %p53, %p54
      %p56 = scmp.ne.s32.totalorder %s42, %s43
      %p57 = scmp.eq.s32.totalorder %s21, 1
      %p58 = por %p56, %p57
      %p60 = scmp.ne.s32.totalorder %s43, %s59
      %p61 = scmp.eq.s32.totalorder %s21, 0
      %p62 = por %p60, %p61
      %s64 = sadd.s32 %s63, 1
      %p67 = scmp.eq.s32.totalorder %s15, 1
      %p68 = scmp.ne.s32.totalorder %s63, %s65
      %p69 = scmp.eq.s32.totalorder %s15, 0
      %p70 = por %p68, %p69
      %p71 = scmp.ne.s32.totalorder %s63, %s65
      %p72 = scmp.eq.s32.totalorder %s20, 1
      %p73 = por %p71, %p72
      %p74 = scmp.ne.s32.totalorder %s65, %s66
      %p75 = scmp.eq.s32.totalorder %s20, 0
      %p76 = por %p74, %p75
      %p77 = scmp.ne.s32.totalorder %s65, %s66
      %p78 = scmp.eq.s32.totalorder %s21, 1
      %p79 = por %p77, %p78
      %p81 = scmp.ne.s32.totalorder %s66, %s80
      %p82 = scmp.eq.s32.totalorder %s21, 0
      %p83 = por %p81, %p82
      %s84 = ssub.s32 %s22, %s34
      %s85 = ssub.s32 %s23, %s30
      %s86 = sor.u32 %s84, %s85
      %p87 = scmp.eq.s32.totalorder %s86, 0
      %s89 = sadd.s32 %s88, 1
      %s90 = scalar_select %p87, %s88, %s89
      %p93 = pneg %p87
      %p94 = scmp.eq.s32.totalorder %s15, 1
      %p95 = por %p93, %p94
      %p96 = scmp.ne.s32.totalorder %s88, %s91
      %p97 = scmp.eq.s32.totalorder %s15, 0
      %p98 = por %p96, %p97
      %p99 = scmp.ne.s32.totalorder %s88, %s91
      %p100 = scmp.eq.s32.totalorder %s20, 1
      %p101 = por %p99, %p100
      %p102 = scmp.ne.s32.totalorder %s91, %s92
      %p103 = scmp.eq.s32.totalorder %s20, 0
      %p104 = por %p102, %p103
      %p105 = scmp.ne.s32.totalorder %s91, %s92
      %p106 = scmp.eq.s32.totalorder %s21, 1
      %p107 = por %p105, %p106
      %p109 = scmp.ne.s32.totalorder %s92, %s108
      %p110 = scmp.eq.s32.totalorder %s21, 0
      %p111 = por %p109, %p110
      %p112 = scmp.le.s32.totalorder 1, %s15
      %p113 = scmp.lt.s32.totalorder %s15, 3
      %p114 = pnand %p112, %p113
      %p115 = pneg %p114
      // Predicated region
      $region9: #{tpu_custom_call.1} parent=5 // pred_check
        _
      $region10: #{tpu_custom_call.1} parent=5 // pred_check_branch
        %117 = sbr.rel (%p114) target = $region12
      $region11: #{tpu_custom_call.1} parent=5 // pred_region
        %s118 = ssub.s32 %s15, 1
        // Predicated region
        $region13: #{tpu_custom_call.1} parent=11 // pred_check
          %p119 = pneg %p76
        $region14: #{tpu_custom_call.1} parent=11 // pred_check_branch
          %121 = sbr.rel (%p119) target = $region16
        $region15: #{tpu_custom_call.1} parent=11 // pred_region
          %123 = vsyncadd [#allocation6], 0
          %s124 = sshll.u32 %s1, 4
          %s125 = int_to_ptr.hbm [resolvable:$true] %s124
          %s126 = sshll.u32 [#allocation5], 4
          %s127 = int_to_ptr.vmem [resolvable:$true] %s126
          %132 = dma.hbm_to_vmem [thread:$0]  %s125, 64, %s127, [#allocation6], 16, 16, 1
        $region16: #{tpu_custom_call.1} parent=11 // pred_fallthru
          _
      $region12: #{tpu_custom_call.1} parent=5 // pred_fallthru
        _
      %p133 = scmp.lt.s32.totalorder %s15, 2
      // Predicated region
      $region17: #{tpu_custom_call.1} parent=5 // pred_check
        %p134 = pneg %p133
      $region18: #{tpu_custom_call.1} parent=5 // pred_check_branch
        %136 = sbr.rel (%p134) target = $region20
      $region19: #{tpu_custom_call.1} parent=5 // pred_region
        // Predicated region
        $region21: #{tpu_custom_call.1} parent=19 // pred_check
          %p137 = pneg %p49
        $region22: #{tpu_custom_call.1} parent=19 // pred_check_branch
          %139 = sbr.rel (%p137) target = $region24
        $region23: #{tpu_custom_call.1} parent=19 // pred_region
          %s140 = sand.u32 %s39, 1
          %s141 = scalar_lea.sflag [#allocation3], %s140
          %s142 = sand.u32 %s39, 1
          %s143 = smul.addr %s142, 8
          %s144 = scalar_lea.vmem [#allocation2], %s143
          %146 = vsyncadd %s141, 0
          %s147 = smul.addr %s22, 4
          %s148 = sadd.s32 %s23, %s147
          %s149 = smul.addr %s148, 2
          %s150 = scalar_lea.hbm %s0, %s149
          %s151 = sshll.u32 %s150, 4
          %s152 = int_to_ptr.hbm [resolvable:$true] %s151
          %s153 = sshll.u32 %s144, 4
          %s154 = int_to_ptr.vmem [resolvable:$true] %s153
          %159 = dma.hbm_to_vmem [thread:$0]  %s152, 128, %s154, %s141, 32, 32, 2
        $region24: #{tpu_custom_call.1} parent=19 // pred_fallthru
          _
      $region20: #{tpu_custom_call.1} parent=5 // pred_fallthru
        _
      %p160 = scmp.le.s32.totalorder 1, %s15
      %p161 = scmp.lt.s32.totalorder %s15, 3
      %p162 = pnand %p160, %p161
      %p163 = pneg %p162
      // Predicated region
      $region25: #{tpu_custom_call.1} parent=5 // pred_check
        _
      $region26: #{tpu_custom_call.1} parent=5 // pred_check_branch
        %165 = sbr.rel (%p162) target = $region28
      $region27: #{tpu_custom_call.1} parent=5 // pred_region
        %s166 = ssub.s32 %s15, 1
        %s167 = sand.u32 %s42, 1
        %s168 = scalar_lea.sflag [#allocation3], %s167
        %s169 = sand.u32 %s42, 1
        %s170 = smul.addr %s169, 8
        %s171 = scalar_lea.vmem [#allocation2], %s170
        // Predicated region
        $region29: #{tpu_custom_call.1} parent=27 // pred_check
          %p172 = pneg %p55
        $region30: #{tpu_custom_call.1} parent=27 // pred_check_branch
          %174 = sbr.rel (%p172) target = $region32
        $region31: #{tpu_custom_call.1} parent=27 // pred_region
          %176 = dma.done %s168, 128
        $region32: #{tpu_custom_call.1} parent=27 // pred_fallthru
          _
        // Predicated region
        $region33: #{tpu_custom_call.1} parent=27 // pred_check
          %p177 = pneg %p76
        $region34: #{tpu_custom_call.1} parent=27 // pred_check_branch
          %179 = sbr.rel (%p177) target = $region36
        $region35: #{tpu_custom_call.1} parent=27 // pred_region
          %181 = dma.done [#allocation6], 64
        $region36: #{tpu_custom_call.1} parent=27 // pred_fallthru
          _
        %s182 = sand.u32 %s42, 1
        %s183 = scalar_lea.sflag [#allocation3], %s182
        %s184 = sand.u32 %s42, 1
        %s185 = smul.addr %s184, 8
        %s186 = scalar_lea.vmem [#allocation2], %s185
        %p187 = pneg %p55
        %p188 = pneg %p52
        %p189 = pneg %p76
        %p190 = pneg %p73
        %p191 = pneg %p104
        %p192 = pneg %p101
        %s193 = sand.u32 %s91, 1
        %s194 = scalar_lea.sflag [#allocation4], %s193
        %s195 = sand.u32 %s91, 1
        %s196 = smul.addr %s195, 8
        %s197 = scalar_lea.vmem [#allocation7], %s196
        %v198 = vld [vmem:[%s171] sm:$0x3]
        %v199 = vld [vmem:[%s171 + $0x2] sm:$0x3]
        %v200 = vld [vmem:[%s171 + $0x4] sm:$0x3]
        %v201 = vld [vmem:[%s171 + $0x6] sm:$0x3]
        %vm202 = vcmask 1041408
        %v203 = vsel %vm202, %v198, 0.0
        %v204 = vsel %vm202, %v199, 0.0
        %v205 = vadd.f32 %v203, %v204
        %v206 = vsel %vm202, %v200, 0.0
        %v207 = vadd.f32 %v205, %v206
        %v208 = vsel %vm202, %v201, 0.0
        %v209 = vadd.f32 %v207, %v208
        %v210 = vmul.f32 %v209, 0.25
        %v211 = vsub.f32 %v198, %v210
        %v212 = vsub.f32 %v199, %v210
        %v213 = vsub.f32 %v200, %v210
        %v214 = vsub.f32 %v201, %v210
        %v215 = vmul.f32 %v211, %v211
        %v216 = vmul.f32 %v212, %v212
        %v217 = vmul.f32 %v213, %v213
        %v218 = vmul.f32 %v214, %v214
        %v219 = vsel %vm202, %v215, 0.0
        %v220 = vsel %vm202, %v216, 0.0
        %v221 = vadd.f32 %v219, %v220
        %v222 = vsel %vm202, %v217, 0.0
        %v223 = vadd.f32 %v221, %v222
        %v224 = vsel %vm202, %v218, 0.0
        %v225 = vadd.f32 %v223, %v224
        %v226 = vmul.f32 %v225, 0.25
        %v227 = vadd.f32 %v226, 1e-05
        %v228 = vrsqrt.pop %v227
        %v229 = vmul.f32 %v228, %v227
        %v230 = vmul.f32 %v229, %v228
        %v231 = vmul.f32 0.5, %v230
        %v232 = vsub.f32 1.5, %v231
        %v233 = vmul.f32 %v228, %v232
        %vm234 = vweird.f32 %v227
        %vm235 = vweird.f32 %v228
        %vm236 = vmor %vm234, %vm235
        %v237 = vsel %vm236, %v228, %v233
        %v238 = vld [vmem:[#allocation5] sm:$0x1]
        %v239 = vld [vmem:[#allocation5 + $0x1] sm:$0x1]
        %v240 = vld [vmem:[#allocation5 + $0x2] sm:$0x1]
        %v241 = vld [vmem:[#allocation5 + $0x3] sm:$0x1]
        %v246 = vperm.slane %v238, 0
        %v247 = vperm.slane %v239, 0
        %v248 = vperm.slane %v240, 0
        %v249 = vperm.slane %v241, 0
        %v254 = vmul.f32 %v237, %v246
        %v255 = vmul.f32 %v237, %v247
        %v256 = vmul.f32 %v237, %v248
        %v257 = vmul.f32 %v237, %v249
        %v258 = vmul.f32 %v211, %v254
        %v259 = vmul.f32 %v212, %v255
        %v260 = vmul.f32 %v213, %v256
        %v261 = vmul.f32 %v214, %v257
        %262 = vst [vmem:[%s197] sm:$0x3] %v258
        %263 = vst [vmem:[%s197 + $0x2] sm:$0x3] %v259
        %264 = vst [vmem:[%s197 + $0x4] sm:$0x3] %v260
        %265 = vst [vmem:[%s197 + $0x6] sm:$0x3] %v261
        %s266 = sand.u32 %s91, 1
        %s267 = scalar_lea.sflag [#allocation4], %s266
        %s268 = sand.u32 %s91, 1
        %s269 = smul.addr %s268, 8
        %s270 = scalar_lea.vmem [#allocation7], %s269
        // Predicated region
        $region37: #{tpu_custom_call.1} parent=27 // pred_check
          %p271 = pneg %p101
        $region38: #{tpu_custom_call.1} parent=27 // pred_check_branch
          %273 = sbr.rel (%p271) target = $region40
        $region39: #{tpu_custom_call.1} parent=27 // pred_region
          %275 = vsyncadd %s267, 0
          %s276 = smul.addr %s24, 4
          %s277 = sadd.s32 %s25, %s276
          %s278 = smul.addr %s277, 2
          %s279 = scalar_lea.hbm %s2, %s278
          %s280 = sshll.u32 %s270, 4
          %s281 = int_to_ptr.vmem [resolvable:$true] %s280
          %s282 = sshll.u32 %s279, 4
          %s283 = int_to_ptr.hbm [resolvable:$true] %s282
          %288 = dma.vmem_to_hbm [thread:$0]  %s281, 128, %s283, %s267, 32, 32, 2
        $region40: #{tpu_custom_call.1} parent=27 // pred_fallthru
          _
      $region28: #{tpu_custom_call.1} parent=5 // pred_fallthru
        _
      %p289 = scmp.le.s32.totalorder 2, %s15
      // Predicated region
      $region41: #{tpu_custom_call.1} parent=5 // pred_check
        %p290 = pneg %p289
      $region42: #{tpu_custom_call.1} parent=5 // pred_check_branch
        %292 = sbr.rel (%p290) target = $region44
      $region43: #{tpu_custom_call.1} parent=5 // pred_region
        %s293 = ssub.s32 %s15, 2
        // Predicated region
        $region45: #{tpu_custom_call.1} parent=43 // pred_check
          %p294 = pneg %p107
        $region46: #{tpu_custom_call.1} parent=43 // pred_check_branch
          %296 = sbr.rel (%p294) target = $region48
        $region47: #{tpu_custom_call.1} parent=43 // pred_region
          %s297 = sand.u32 %s92, 1
          %s298 = scalar_lea.sflag [#allocation4], %s297
          %s299 = sand.u32 %s92, 1
          %s300 = smul.addr %s299, 8
          %s301 = scalar_lea.vmem [#allocation7], %s300
          %303 = dma.done %s298, 128
        $region48: #{tpu_custom_call.1} parent=43 // pred_fallthru
          _
      $region44: #{tpu_custom_call.1} parent=5 // pred_fallthru
        _
    $region6: #{tpu_custom_call.1} parent=1 // loop_footer
      %s19 = sadd.s32 1, %s15
    $region7: #{tpu_custom_call.1} parent=1 // loop_footer_branch
      %14 = sbr.rel target = $region3
    $region8: #{tpu_custom_call.1} parent=1 // loop_exit
      _
    %304 = vsyncpa [#allocation3], 1
    %s305 = scalar_lea.sflag [#allocation3], 1
    %306 = vsyncpa %s305, 1
    %307 = vsyncpa [#allocation6], 1
    %308 = vsyncpa [#allocation4], 1
    %s309 = scalar_lea.sflag [#allocation4], 1
    %310 = vsyncpa %s309, 1

</llo_original>
